<compile_context>
chip_gen: v7x
topology: tpu7x:2x2x1
jax: 0.10.0
libtpu: 0.0.40
codegen_flags: <defaults>
</compile_context>

<pallas_src>
import jax
import jax.numpy as jnp
from jax.experimental import pallas as pl
from jax.experimental.pallas import tpu as pltpu


def perceptron_kernel(x_ref, w1_ref, b1_ref, w2_ref, b2_ref, o_ref):
    # fc1 on the MXU: (BT, D) @ (D, H) with an f32 accumulator.
    # x/w1 may be bf16 -- no explicit upcast; the MXU handles bf16 natively.
    h = jnp.dot(x_ref[...], w1_ref[...], preferred_element_type=jnp.float32)
    # Bias + ReLU in f32 on the VPU.
    h = jnp.maximum(h + b1_ref[...], 0.0)
    # fc2 (K=8, N=1): skip the MXU; elementwise mul (VALU) + cross-lane
    # reduce (XLU) on slots that are otherwise idle while streaming x.
    out = jnp.sum(h * w2_ref[...], axis=-1, keepdims=True) + b2_ref[...]
    o_ref[...] = out.astype(o_ref.dtype)


def _round_up(n, m):
    return ((n + m - 1) // m) * m


def perceptron_forward(x, w1, b1, w2_row, b2, *, block_batch=2048):
    """Fused Perceptron forward: relu(x @ w1 + b1) @ w2_row.T + b2.

    x:      [B, D]   f32 or bf16
    w1:     [D, H]   fc1 weight, transposed vs torch (f32 or bf16)
    b1:     [1, H]   f32
    w2_row: [1, H]   fc2 weight stored as a row (f32)
    b2:     [1, 1]   f32
    returns [B, 1]   f32
    """
    B, D = x.shape
    H = w1.shape[1]

    # Batch tile: large enough to amortize the ~0.35us/step pipeline overhead,
    # small enough for scoped VMEM.  A (BT, D) f32 tile is lane-padded to 128
    # lanes in VMEM -> BT*128*4 bytes per buffer, double-buffered:
    # BT=2048 => ~1 MiB/buffer, well within budget on every generation.
    if B >= block_batch:
        bt = block_batch
    else:
        bt = max(_round_up(B, 8), 8)           # single tile, sublane-aligned
    bp = _round_up(B, bt)
    if bp != B:
        x = jnp.pad(x, ((0, bp - B), (0, 0)))  # padded rows are sliced off below

    grid = (bp // bt,)

    out = pl.pallas_call(
        perceptron_kernel,
        out_shape=jax.ShapeDtypeStruct((bp, 1), jnp.float32),
        grid_spec=pltpu.PrefetchScalarGridSpec(
            num_scalar_prefetch=0,
            grid=grid,
            in_specs=[
                pl.BlockSpec((bt, D), lambda i: (i, 0)),   # x: streamed over batch
                pl.BlockSpec((D, H), lambda i: (0, 0)),    # w1: VMEM-resident
                pl.BlockSpec((1, H), lambda i: (0, 0)),    # b1: VMEM-resident
                pl.BlockSpec((1, H), lambda i: (0, 0)),    # w2 row: VMEM-resident
                pl.BlockSpec((1, 1), lambda i: (0, 0)),    # b2: VMEM-resident
            ],
            out_specs=pl.BlockSpec((bt, 1), lambda i: (i, 0)),
        ),
        compiler_params=pltpu.CompilerParams(
            # Independent batch tiles -> shard across both TCs on v7x
            # (harmless on single-TC v5e/v6e).
            dimension_semantics=("parallel",),
        ),
    )(x, w1, b1, w2_row, b2)
    return out[:B]


if __name__ == "__main__":
    key = jax.random.PRNGKey(0)
    k_x, k_w1, k_b1, k_w2, k_b2 = jax.random.split(key, 5)

    input_dim = 32
    hidden = 8     # fc1 out features (fixed by the module)
    batch = 100    # small test shape; block_batch=32 below exercises a
                   # multi-tile grid (4 tiles) plus tail padding (100 -> 128)

    bound1 = 1.0 / (input_dim ** 0.5)
    x = jax.random.normal(k_x, (batch, input_dim), dtype=jnp.float32)
    w1 = jax.random.uniform(k_w1, (input_dim, hidden), jnp.float32, -bound1, bound1)
    b1 = jax.random.uniform(k_b1, (1, hidden), jnp.float32, -bound1, bound1)
    bound2 = 1.0 / (hidden ** 0.5)
    w2_row = jax.random.uniform(k_w2, (1, hidden), jnp.float32, -bound2, bound2)
    b2 = jax.random.uniform(k_b2, (1, 1), jnp.float32, -bound2, bound2)

    # f32 path: multi-tile grid + tail padding.
    out = perceptron_forward(x, w1, b1, w2_row, b2, block_batch=32)
    jax.block_until_ready(out)
    ref = jnp.maximum(x @ w1 + b1, 0.0) @ w2_row.T + b2
    assert out.shape == (batch, 1)
    assert jnp.allclose(out, ref, atol=1e-5), "f32 mismatch vs reference"

    # bf16 activation/weight path (halves HBM traffic for the streamed x);
    # small batch exercises the single-tile code path.
    nb = 24
    xb = x[:nb].astype(jnp.bfloat16)
    w1b = w1.astype(jnp.bfloat16)
    out_bf16 = perceptron_forward(xb, w1b, b1, w2_row, b2)
    jax.block_until_ready(out_bf16)
    ref_bf16 = (jnp.maximum(xb.astype(jnp.float32) @ w1b.astype(jnp.float32) + b1, 0.0)
                @ w2_row.T + b2)
    assert out_bf16.shape == (nb, 1)
    assert jnp.allclose(out_bf16, ref_bf16, atol=5e-3), "bf16 mismatch vs reference"

    print("KERNEL_OK")
</pallas_src>

<mosaic_0001>
module attributes {stable_mosaic.version = 11 : i64} {
  func.func @perceptron_kernel(%arg0: i32, %arg1: memref<32x32xf32, #tpu.memory_space<vmem>>, %arg2: memref<32x8xf32, #tpu.memory_space<vmem>>, %arg3: memref<1x8xf32, #tpu.memory_space<vmem>>, %arg4: memref<1x8xf32, #tpu.memory_space<vmem>>, %arg5: memref<1x1xf32, #tpu.memory_space<vmem>>, %arg6: memref<32x1xf32, #tpu.memory_space<vmem>>) attributes {dimension_semantics = [#tpu.dimension_semantics<parallel>], iteration_bounds = array<i64: 4>, scalar_prefetch = 0 : i64, scratch_operands = 0 : i64, tpu.core_type = #tpu.core_type<tc>, window_params = [{transform_indices = @transform_0, window_bounds = array<i64: 32, 32>}, {pipeline_mode = #tpu.pipeline_mode<synchronous>, transform_indices = @transform_1, window_bounds = array<i64: 32, 8>}, {pipeline_mode = #tpu.pipeline_mode<synchronous>, transform_indices = @transform_2, window_bounds = array<i64: 1, 8>}, {pipeline_mode = #tpu.pipeline_mode<synchronous>, transform_indices = @transform_3, window_bounds = array<i64: 1, 8>}, {pipeline_mode = #tpu.pipeline_mode<synchronous>, transform_indices = @transform_4, window_bounds = array<i64: 1, 1>}, {transform_indices = @transform_5, window_bounds = array<i64: 32, 1>}]} {
    %c0 = arith.constant 0 : index
    %c0_0 = arith.constant 0 : index
    %0 = vector.load %arg1[%c0, %c0_0] : memref<32x32xf32, #tpu.memory_space<vmem>>, vector<32x32xf32>
    %c0_1 = arith.constant 0 : index
    %c0_2 = arith.constant 0 : index
    %1 = vector.load %arg2[%c0_1, %c0_2] : memref<32x8xf32, #tpu.memory_space<vmem>>, vector<32x8xf32>
    %cst = arith.constant dense<0.000000e+00> : vector<32x8xf32>
    %2 = tpu.matmul %0, %1, %cst {dimension_numbers = #tpu.dot_dimension_numbers<[1], [0], [0], [1], [0, 0, 1, 1], [], []>} : vector<32x32xf32>, vector<32x8xf32>, vector<32x8xf32> -> vector<32x8xf32>
    %c0_3 = arith.constant 0 : index
    %c0_4 = arith.constant 0 : index
    %3 = vector.load %arg3[%c0_3, %c0_4] : memref<1x8xf32, #tpu.memory_space<vmem>>, vector<1x8xf32>
    %4 = vector.broadcast %3 : vector<1x8xf32> to vector<32x8xf32>
    %5 = arith.addf %2, %4 : vector<32x8xf32>
    %cst_5 = arith.constant 0.000000e+00 : f32
    %6 = vector.broadcast %cst_5 : f32 to vector<32x8xf32>
    %7 = arith.maximumf %5, %6 : vector<32x8xf32>
    %c0_6 = arith.constant 0 : index
    %c0_7 = arith.constant 0 : index
    %8 = vector.load %arg4[%c0_6, %c0_7] : memref<1x8xf32, #tpu.memory_space<vmem>>, vector<1x8xf32>
    %9 = vector.broadcast %8 : vector<1x8xf32> to vector<32x8xf32>
    %10 = arith.mulf %7, %9 : vector<32x8xf32>
    %cst_8 = arith.constant dense<0.000000e+00> : vector<32xf32>
    %11 = vector.multi_reduction <add>, %10, %cst_8 [1] : vector<32x8xf32> to vector<32xf32>
    %12 = vector.shape_cast %11 : vector<32xf32> to vector<32x1xf32>
    %c0_9 = arith.constant 0 : index
    %c0_10 = arith.constant 0 : index
    %13 = vector.load %arg5[%c0_9, %c0_10] : memref<1x1xf32, #tpu.memory_space<vmem>>, vector<1x1xf32>
    %14 = vector.broadcast %13 : vector<1x1xf32> to vector<32x1xf32>
    %15 = arith.addf %12, %14 : vector<32x1xf32>
    %c0_11 = arith.constant 0 : index
    %c0_12 = arith.constant 0 : index
    %16 = vector.load %arg6[%c0_11, %c0_12] : memref<32x1xf32, #tpu.memory_space<vmem>>, vector<32x1xf32>
    tpu.vector_store %arg6[%c0_11, %c0_12], %15 {strides = array<i32>} : memref<32x1xf32, #tpu.memory_space<vmem>>, vector<32x1xf32>,
    return
  }
  func.func @transform_0(%arg0: i32) -> (i32, i32) {
    %c0_i32 = arith.constant 0 : i32
    %c0_i32_0 = arith.constant 0 : i32
    return %arg0, %c0_i32 : i32, i32
  }
  func.func @transform_1(%arg0: i32) -> (i32, i32) {
    %c0_i32 = arith.constant 0 : i32
    %c0_i32_0 = arith.constant 0 : i32
    %c0_i32_1 = arith.constant 0 : i32
    return %c0_i32, %c0_i32_0 : i32, i32
  }
  func.func @transform_2(%arg0: i32) -> (i32, i32) {
    %c0_i32 = arith.constant 0 : i32
    %c0_i32_0 = arith.constant 0 : i32
    %c0_i32_1 = arith.constant 0 : i32
    return %c0_i32, %c0_i32_0 : i32, i32
  }
  func.func @transform_3(%arg0: i32) -> (i32, i32) {
    %c0_i32 = arith.constant 0 : i32
    %c0_i32_0 = arith.constant 0 : i32
    %c0_i32_1 = arith.constant 0 : i32
    return %c0_i32, %c0_i32_0 : i32, i32
  }
  func.func @transform_4(%arg0: i32) -> (i32, i32) {
    %c0_i32 = arith.constant 0 : i32
    %c0_i32_0 = arith.constant 0 : i32
    %c0_i32_1 = arith.constant 0 : i32
    return %c0_i32, %c0_i32_0 : i32, i32
  }
  func.func @transform_5(%arg0: i32) -> (i32, i32) {
    %c0_i32 = arith.constant 0 : i32
    %c0_i32_0 = arith.constant 0 : i32
    return %arg0, %c0_i32 : i32, i32
  }
}

</mosaic_0001>

<llo_original>
// kernel: tpu_custom_call.1
$region0: #{tpu_custom_call.1}
  #allocation0 [shape = 'u32[]', space=smem, size = 0x4, offset = 0x4, fixed_abs, tag = 'smem constant byte address 0x4 - core index']
  #allocation1 [shape = 'u32[144,128]{1,0:T(1,128)}', space=vmem, size = 0x12000, scoped, tag = 'internal scratch']
  #allocation2 [shape = 'f32[1,1]{1,0:T(1,128)S(1)}', space=vmem, size = 0x200, scoped, tag = 'scoped memory for tpu_custom_call.1']
  %s0 = inlined_call_operand.vmem [shape: f32[128,32], index: 0, kind: input, shape index: {}]
  %s1 = inlined_call_operand.vmem [shape: f32[32,8], index: 1, kind: input, shape index: {}]
  %s2 = inlined_call_operand.vmem [shape: f32[1,8], index: 2, kind: input, shape index: {}]
  %s3 = inlined_call_operand.vmem [shape: f32[1,8], index: 3, kind: input, shape index: {}]
  %s4 = inlined_call_operand.<no memory space> [shape: f32[1,1], index: 4, kind: input, shape index: {}]
  %s5 = inlined_call_operand.vmem [shape: f32[128,1], index: 5, kind: output, shape index: {}]
  %s6 = sld [smem:[#allocation0]]
  $region53: #{tpu_custom_call.1} parent=0
    _
  %s8 = ssub.s32 1, %s6
  %s9 = scalar_select 0, %s8, %s6
  %v10 = vstv %s4
  %11 = vst [vmem:[#allocation2] sm:$0x1] %v10
  loop: start=0, step=1, limit=6
  $region2: #{tpu_custom_call.1} parent=0 // loop_pre_header
    _
  $region3: #{tpu_custom_call.1} parent=0 // loop_header
    %s13 = sphi 0, %s17
    %p14 = scmp.ge.s32.totalorder %s13, 6
    %s23 = sphi 0, %s25
    %s26 = sphi 0, %s23
    %s27 = sphi 0, %s26
    %s43 = sphi 0, %s27
    %s47 = sphi 0, %s47
    %s49 = sphi 0, %s47
    %s50 = sphi 0, %s49
    %s64 = sphi 0, %s50
    %s68 = sphi 0, %s68
    %s70 = sphi 0, %s68
    %s71 = sphi 0, %s70
    %s85 = sphi 0, %s71
    %s89 = sphi 0, %s89
    %s91 = sphi 0, %s89
    %s92 = sphi 0, %s91
    %s106 = sphi 0, %s92
    %s110 = sphi 0, %s110
    %s112 = sphi 0, %s110
    %s113 = sphi 0, %s112
    %s127 = sphi 0, %s113
    %s133 = sphi 0, %s135
    %s136 = sphi 0, %s133
    %s137 = sphi 0, %s136
    %s153 = sphi 0, %s137
  $region4: #{tpu_custom_call.1} parent=0 // loop_header_branch
    %16 = sbr.rel (%p14) target = $region8
  $region5: #{tpu_custom_call.1} parent=0 // loop_body
    %s18 = ssub.s32 %s13, 1
    %s19 = ssub.s32 %s13, 2
    %s20 = sadd.s32 %s13, 1
    %s21 = ssub.s32 %s13, %s20
    %p22 = scmp.eq.s32.totalorder %s21, 0
    %s24 = sadd.s32 %s23, 1
    %s25 = scalar_select %p22, %s23, %s24
    %p28 = pneg %p22
    %p29 = scmp.eq.s32.totalorder %s13, 3
    %p30 = por %p28, %p29
    %p31 = scmp.ne.s32.totalorder %s23, %s26
    %p32 = scmp.eq.s32.totalorder %s13, 0
    %p33 = por %p31, %p32
    %p34 = scmp.ne.s32.totalorder %s23, %s26
    %p35 = scmp.eq.s32.totalorder %s18, 3
    %p36 = por %p34, %p35
    %p37 = scmp.ne.s32.totalorder %s26, %s27
    %p38 = scmp.eq.s32.totalorder %s18, 0
    %p39 = por %p37, %p38
    %p40 = scmp.ne.s32.totalorder %s26, %s27
    %p41 = scmp.eq.s32.totalorder %s19, 3
    %p42 = por %p40, %p41
    %p44 = scmp.ne.s32.totalorder %s27, %s43
    %p45 = scmp.eq.s32.totalorder %s19, 0
    %p46 = por %p44, %p45
    %s48 = sadd.s32 %s47, 1
    %p51 = scmp.eq.s32.totalorder %s13, 3
    %p52 = scmp.ne.s32.totalorder %s47, %s49
    %p53 = scmp.eq.s32.totalorder %s13, 0
    %p54 = por %p52, %p53
    %p55 = scmp.ne.s32.totalorder %s47, %s49
    %p56 = scmp.eq.s32.totalorder %s18, 3
    %p57 = por %p55, %p56
    %p58 = scmp.ne.s32.totalorder %s49, %s50
    %p59 = scmp.eq.s32.totalorder %s18, 0
    %p60 = por %p58, %p59
    %p61 = scmp.ne.s32.totalorder %s49, %s50
    %p62 = scmp.eq.s32.totalorder %s19, 3
    %p63 = por %p61, %p62
    %p65 = scmp.ne.s32.totalorder %s50, %s64
    %p66 = scmp.eq.s32.totalorder %s19, 0
    %p67 = por %p65, %p66
    %s69 = sadd.s32 %s68, 1
    %p72 = scmp.eq.s32.totalorder %s13, 3
    %p73 = scmp.ne.s32.totalorder %s68, %s70
    %p74 = scmp.eq.s32.totalorder %s13, 0
    %p75 = por %p73, %p74
    %p76 = scmp.ne.s32.totalorder %s68, %s70
    %p77 = scmp.eq.s32.totalorder %s18, 3
    %p78 = por %p76, %p77
    %p79 = scmp.ne.s32.totalorder %s70, %s71
    %p80 = scmp.eq.s32.totalorder %s18, 0
    %p81 = por %p79, %p80
    %p82 = scmp.ne.s32.totalorder %s70, %s71
    %p83 = scmp.eq.s32.totalorder %s19, 3
    %p84 = por %p82, %p83
    %p86 = scmp.ne.s32.totalorder %s71, %s85
    %p87 = scmp.eq.s32.totalorder %s19, 0
    %p88 = por %p86, %p87
    %s90 = sadd.s32 %s89, 1
    %p93 = scmp.eq.s32.totalorder %s13, 3
    %p94 = scmp.ne.s32.totalorder %s89, %s91
    %p95 = scmp.eq.s32.totalorder %s13, 0
    %p96 = por %p94, %p95
    %p97 = scmp.ne.s32.totalorder %s89, %s91
    %p98 = scmp.eq.s32.totalorder %s18, 3
    %p99 = por %p97, %p98
    %p100 = scmp.ne.s32.totalorder %s91, %s92
    %p101 = scmp.eq.s32.totalorder %s18, 0
    %p102 = por %p100, %p101
    %p103 = scmp.ne.s32.totalorder %s91, %s92
    %p104 = scmp.eq.s32.totalorder %s19, 3
    %p105 = por %p103, %p104
    %p107 = scmp.ne.s32.totalorder %s92, %s106
    %p108 = scmp.eq.s32.totalorder %s19, 0
    %p109 = por %p107, %p108
    %s111 = sadd.s32 %s110, 1
    %p114 = scmp.eq.s32.totalorder %s13, 3
    %p115 = scmp.ne.s32.totalorder %s110, %s112
    %p116 = scmp.eq.s32.totalorder %s13, 0
    %p117 = por %p115, %p116
    %p118 = scmp.ne.s32.totalorder %s110, %s112
    %p119 = scmp.eq.s32.totalorder %s18, 3
    %p120 = por %p118, %p119
    %p121 = scmp.ne.s32.totalorder %s112, %s113
    %p122 = scmp.eq.s32.totalorder %s18, 0
    %p123 = por %p121, %p122
    %p124 = scmp.ne.s32.totalorder %s112, %s113
    %p125 = scmp.eq.s32.totalorder %s19, 3
    %p126 = por %p124, %p125
    %p128 = scmp.ne.s32.totalorder %s113, %s127
    %p129 = scmp.eq.s32.totalorder %s19, 0
    %p130 = por %p128, %p129
    %s131 = ssub.s32 %s13, %s20
    %p132 = scmp.eq.s32.totalorder %s131, 0
    %s134 = sadd.s32 %s133, 1
    %s135 = scalar_select %p132, %s133, %s134
    %p138 = pneg %p132
    %p139 = scmp.eq.s32.totalorder %s13, 3
    %p140 = por %p138, %p139
    %p141 = scmp.ne.s32.totalorder %s133, %s136
    %p142 = scmp.eq.s32.totalorder %s13, 0
    %p143 = por %p141, %p142
    %p144 = scmp.ne.s32.totalorder %s133, %s136
    %p145 = scmp.eq.s32.totalorder %s18, 3
    %p146 = por %p144, %p145
    %p147 = scmp.ne.s32.totalorder %s136, %s137
    %p148 = scmp.eq.s32.totalorder %s18, 0
    %p149 = por %p147, %p148
    %p150 = scmp.ne.s32.totalorder %s136, %s137
    %p151 = scmp.eq.s32.totalorder %s19, 3
    %p152 = por %p150, %p151
    %p154 = scmp.ne.s32.totalorder %s137, %s153
    %p155 = scmp.eq.s32.totalorder %s19, 0
    %p156 = por %p154, %p155
    %p157 = scmp.le.s32.totalorder 1, %s13
    %p158 = scmp.lt.s32.totalorder %s13, 5
    %p159 = pnand %p157, %p158
    %p160 = pneg %p159
    // Predicated region
    $region9: #{tpu_custom_call.1} parent=5 // pred_check
      _
    $region10: #{tpu_custom_call.1} parent=5 // pred_check_branch
      %162 = sbr.rel (%p159) target = $region12
    $region11: #{tpu_custom_call.1} parent=5 // pred_region
      %s163 = ssub.s32 %s13, 1
      // Predicated region
      $region13: #{tpu_custom_call.1} parent=11 // pred_check
        %p164 = pneg %p60
      $region14: #{tpu_custom_call.1} parent=11 // pred_check_branch
        %166 = sbr.rel (%p164) target = $region16
      $region15: #{tpu_custom_call.1} parent=11 // pred_region
        _
      $region16: #{tpu_custom_call.1} parent=11 // pred_fallthru
        _
      // Predicated region
      $region17: #{tpu_custom_call.1} parent=11 // pred_check
        %p167 = pneg %p81
      $region18: #{tpu_custom_call.1} parent=11 // pred_check_branch
        %169 = sbr.rel (%p167) target = $region20
      $region19: #{tpu_custom_call.1} parent=11 // pred_region
        _
      $region20: #{tpu_custom_call.1} parent=11 // pred_fallthru
        _
      // Predicated region
      $region21: #{tpu_custom_call.1} parent=11 // pred_check
        %p170 = pneg %p102
      $region22: #{tpu_custom_call.1} parent=11 // pred_check_branch
        %172 = sbr.rel (%p170) target = $region24
      $region23: #{tpu_custom_call.1} parent=11 // pred_region
        _
      $region24: #{tpu_custom_call.1} parent=11 // pred_fallthru
        _
      // Predicated region
      $region25: #{tpu_custom_call.1} parent=11 // pred_check
        %p173 = pneg %p123
      $region26: #{tpu_custom_call.1} parent=11 // pred_check_branch
        %175 = sbr.rel (%p173) target = $region28
      $region27: #{tpu_custom_call.1} parent=11 // pred_region
        _
      $region28: #{tpu_custom_call.1} parent=11 // pred_fallthru
        _
    $region12: #{tpu_custom_call.1} parent=5 // pred_fallthru
      _
    %p176 = scmp.lt.s32.totalorder %s13, 4
    // Predicated region
    $region29: #{tpu_custom_call.1} parent=5 // pred_check
      %p177 = pneg %p176
    $region30: #{tpu_custom_call.1} parent=5 // pred_check_branch
      %179 = sbr.rel (%p177) target = $region32
    $region31: #{tpu_custom_call.1} parent=5 // pred_region
      // Predicated region
      $region33: #{tpu_custom_call.1} parent=31 // pred_check
        %p180 = pneg %p33
      $region34: #{tpu_custom_call.1} parent=31 // pred_check_branch
        %182 = sbr.rel (%p180) target = $region36
      $region35: #{tpu_custom_call.1} parent=31 // pred_region
        %s183 = smul.u32 4, %s13
        %p184 = scmp.lt.s32.totalorder %s183, 15
        %s185 = scalar_select %p184, %s183, 15
        %s186 = smul.addr %s185, 8
        %s187 = scalar_lea.vmem %s0, %s186
        %s188 = smul.u32 4, %s13
      $region36: #{tpu_custom_call.1} parent=31 // pred_fallthru
        _
    $region32: #{tpu_custom_call.1} parent=5 // pred_fallthru
      _
    %p189 = scmp.le.s32.totalorder 1, %s13
    %p190 = scmp.lt.s32.totalorder %s13, 5
    %p191 = pnand %p189, %p190
    %p192 = pneg %p191
    // Predicated region
    $region37: #{tpu_custom_call.1} parent=5 // pred_check
      _
    $region38: #{tpu_custom_call.1} parent=5 // pred_check_branch
      %194 = sbr.rel (%p191) target = $region40
    $region39: #{tpu_custom_call.1} parent=5 // pred_region
      %s195 = ssub.s32 %s13, 1
      %s196 = smul.u32 4, %s18
      %p197 = scmp.lt.s32.totalorder %s196, 15
      %s198 = scalar_select %p197, %s196, 15
      %s199 = smul.addr %s198, 8
      %s200 = scalar_lea.vmem %s0, %s199
      %p201 = pneg %p39
      %p202 = pneg %p36
      %p203 = pneg %p60
      %p204 = pneg %p57
      %p205 = pneg %p81
      %p206 = pneg %p78
      %p207 = pneg %p102
      %p208 = pneg %p99
      %p209 = pneg %p123
      %p210 = pneg %p120
      %p211 = pneg %p149
      %p212 = pneg %p146
      %s213 = smul.u32 4, %s18
      %p214 = scmp.lt.s32.totalorder %s213, 15
      %s215 = scalar_select %p214, %s213, 15
      %s216 = smul.addr %s215, 8
      %s217 = scalar_lea.vmem %s5, %s216
      %s218 = smul.u32 4, %s18
      %p219 = scmp.lt.s32.totalorder %s218, 15
      %s220 = scalar_select %p219, %s218, 15
      %s221 = smul.addr %s220, 8
      %s222 = scalar_lea.vmem %s0, %s221
      %s223 = smul.u32 4, %s18
      %s224 = smul.u32 4, %s18
      %p225 = scmp.lt.s32.totalorder %s224, 15
      %s226 = scalar_select %p225, %s224, 15
      %s227 = smul.addr %s226, 8
      %s228 = scalar_lea.vmem %s5, %s227
      %s229 = smul.u32 4, %s18
      %v230 = vld [vmem:[%s222] sm:$0xff]
      %v231 = vld [vmem:[%s222 + $0x8] sm:$0xff]
      %v232 = vld [vmem:[%s222 + $0x10] sm:$0xff]
      %v233 = vld [vmem:[%s222 + $0x18] sm:$0xff]
      %v234 = vld [vmem:[%s1] sm:$0xff]
      %v235 = vld [vmem:[%s1 + $0x8] sm:$0xff]
      %v236 = vld [vmem:[%s1 + $0x10] sm:$0xff]
      %v237 = vld [vmem:[%s1 + $0x18] sm:$0xff]
      %v238 = vld [vmem:[%s2] sm:$0x1]
      %v240 = vlaneseq
      %v241 = vshrl.u32 %v240, 7
      %v242 = vsub.s32 0, %v241
      %v243 = vrot.slane %v238, %v242
      %vm245 = vcmask 261120
      %v247 = vsel %vm245, %v230, 0
      %v250 = vsel %vm245, %v231, 0
      %v253 = vsel %vm245, %v232, 0
      %v256 = vsel %vm245, %v233, 0
      %258 = vmatprep.subr.mxu0 0.0
      %259 = vmatpush1.msra.mxu0 %v234
      %260 = vmatprep.subr.mxu0 0.0
      %261 = vmatpush1.msra.mxu0 %v235
      %262 = vmatprep.subr.mxu0 0.0
      %263 = vmatpush1.msra.mxu0 %v236
      %264 = vmatprep.subr.mxu0 0.0
      %265 = vmatpush1.msra.mxu0 %v237
      %266 = vmatprep.subr.mxu0 0.0
      %267 = vmatpush1.msra.mxu0 0.0
      %268 = vmatprep.subr.mxu0 0.0
      %269 = vmatpush1.msra.mxu0 0.0
      %270 = vmatprep.subr.mxu0 0.0
      %271 = vmatpush1.msra.mxu0 0.0
      %272 = vmatprep.subr.mxu0 0.0
      %273 = vmatpush1.msra.mxu0 0.0
      %274 = vmatprep.subr.mxu0 0.0
      %275 = vmatpush1.msra.mxu0 0.0
      %276 = vmatprep.subr.mxu0 0.0
      %277 = vmatpush1.msra.mxu0 0.0
      %278 = vmatprep.subr.mxu0 0.0
      %279 = vmatpush1.msra.mxu0 0.0
      %280 = vmatprep.subr.mxu0 0.0
      %281 = vmatpush1.msra.mxu0 0.0
      %282 = vmatprep.subr.mxu0 0.0
      %283 = vmatpush1.msra.mxu0 0.0
      %284 = vmatprep.subr.mxu0 0.0
      %285 = vmatpush1.msra.mxu0 0.0
      %286 = vmatprep.subr.mxu0 0.0
      %287 = vmatpush1.msra.mxu0 0.0
      %288 = vmatprep.subr.mxu0 0.0
      %289 = vmatpush1.msra.mxu0 0.0
      %290 = vmatprep.subr.mxu0 0.0
      %291 = vmatpush1.msra.mxu0 0.0
      %292 = vmatprep.subr.mxu0 0.0
      %293 = vmatpush1.msra.mxu0 0.0
      %294 = vmatprep.subr.mxu0 0.0
      %295 = vmatpush1.msra.mxu0 0.0
      %296 = vmatprep.subr.mxu0 0.0
      %297 = vmatpush1.msra.mxu0 0.0
      %298 = vmatprep.subr.mxu0 0.0
      %299 = vmatpush1.msra.mxu0 0.0
      %300 = vmatprep.subr.mxu0 0.0
      %301 = vmatpush1.msra.mxu0 0.0
      %302 = vmatprep.subr.mxu0 0.0
      %303 = vmatpush1.msra.mxu0 0.0
      %304 = vmatprep.subr.mxu0 0.0
      %305 = vmatpush1.msra.mxu0 0.0
      %306 = vmatprep.subr.mxu0 0.0
      %307 = vmatpush1.msra.mxu0 0.0
      %308 = vmatprep.subr.mxu0 0.0
      %309 = vmatpush1.msra.mxu0 0.0
      %310 = vmatprep.subr.mxu0 0.0
      %311 = vmatpush1.msra.mxu0 0.0
      %312 = vmatprep.subr.mxu0 0.0
      %313 = vmatpush1.msra.mxu0 0.0
      %314 = vmatprep.subr.mxu0 0.0
      %315 = vmatpush1.msra.mxu0 0.0
      %316 = vmatprep.subr.mxu0 0.0
      %317 = vmatpush1.msra.mxu0 0.0
      %318 = vmatprep.subr.mxu0 0.0
      %319 = vmatpush1.msra.mxu0 0.0
      %320 = vmatprep.subr.mxu0 0.0
      %321 = vmatpush1.msra.mxu0 0.0
      %322 = vmatprep.mubr.f32.mxu0 0.0
      %323 = vmatmul.mubr.f32.gmra.mrb[0].mxu0 %v247
      %v324 = vpop.f32.mrb[0].mxu0
      %v325 = vadd.f32 %v243, %v324
      %v326 = vpop.f32.mrb[0].mxu0
      %327 = vmatprep.mubr.f32.mxu0 0.0
      %328 = vmatmul.mubr.f32.gmra.mrb[0].mxu0 %v250
      %v329 = vpop.f32.mrb[0].mxu0
      %v330 = vadd.f32 %v243, %v329
      %v331 = vpop.f32.mrb[0].mxu0
      %332 = vmatprep.mubr.f32.mxu0 0.0
      %333 = vmatmul.mubr.f32.gmra.mrb[0].mxu0 %v253
      %v334 = vpop.f32.mrb[0].mxu0
      %v335 = vadd.f32 %v243, %v334
      %v336 = vpop.f32.mrb[0].mxu0
      %337 = vmatprep.mubr.f32.mxu0 0.0
      %338 = vmatmul.mubr.f32.gmra.mrb[0].mxu0 %v256
      %v339 = vpop.f32.mrb[0].mxu0
      %v340 = vadd.f32 %v243, %v339
      %v341 = vpop.f32.mrb[0].mxu0
      %342 = vdwg.mxu0
      %v343 = vmax.f32 %v325, 0.0
      %v344 = vmax.f32 %v330, 0.0
      %v345 = vmax.f32 %v335, 0.0
      %v346 = vmax.f32 %v340, 0.0
      %v347 = vld [vmem:[%s3] sm:$0x1]
      %v349 = vlaneseq
      %v350 = vshrl.u32 %v349, 7
      %v351 = vsub.s32 0, %v350
      %v352 = vrot.slane %v347, %v351
      %v354 = vmul.f32 %v343, %v352
      %v355 = vmul.f32 %v344, %v352
      %v356 = vmul.f32 %v345, %v352
      %v357 = vmul.f32 %v346, %v352
      %vm358 = vcmask 64512
      %v359 = vsel %vm358, %v354, 0.0
      %360 = vadd.xlane.f32.xlu0 %v359
      %v361 = vpop.xlane.xlu0 %360
      %v362 = vsel %vm358, %v355, 0.0
      %363 = vadd.xlane.f32.xlu0 %v362
      %v364 = vpop.xlane.xlu0 %363
      %v365 = vsel %vm358, %v356, 0.0
      %366 = vadd.xlane.f32.xlu0 %v365
      %v367 = vpop.xlane.xlu0 %366
      %v368 = vsel %vm358, %v357, 0.0
      %369 = vadd.xlane.f32.xlu0 %v368
      %v370 = vpop.xlane.xlu0 %369
      %v371 = vld [vmem:[#allocation2] sm:$0x1]
      %v373 = vlaneseq
      %v374 = vshrl.u32 %v373, 7
      %v375 = vsub.s32 0, %v374
      %v376 = vrot.slane %v371, %v375
      %v378 = vadd.f32 %v361, %v376
      %v379 = vadd.f32 %v364, %v376
      %v380 = vadd.f32 %v367, %v376
      %v381 = vadd.f32 %v370, %v376
      %vm382 = vcmask 7168
      %383 = vst.msk [vmem:[%s228] sm:$0xff] %vm382, %v378
      %384 = vst.msk [vmem:[%s228 + $0x8] sm:$0xff] %vm382, %v379
      %385 = vst.msk [vmem:[%s228 + $0x10] sm:$0xff] %vm382, %v380
      %386 = vst.msk [vmem:[%s228 + $0x18] sm:$0xff] %vm382, %v381
      %s387 = smul.u32 4, %s18
      %p388 = scmp.lt.s32.totalorder %s387, 15
      %s389 = scalar_select %p388, %s387, 15
      %s390 = smul.addr %s389, 8
      %s391 = scalar_lea.vmem %s5, %s390
      // Predicated region
      $region41: #{tpu_custom_call.1} parent=39 // pred_check
        %p392 = pneg %p146
      $region42: #{tpu_custom_call.1} parent=39 // pred_check_branch
        %394 = sbr.rel (%p392) target = $region44
      $region43: #{tpu_custom_call.1} parent=39 // pred_region
        %s395 = smul.u32 4, %s18
      $region44: #{tpu_custom_call.1} parent=39 // pred_fallthru
        _
    $region40: #{tpu_custom_call.1} parent=5 // pred_fallthru
      _
    %p396 = scmp.le.s32.totalorder 2, %s13
    // Predicated region
    $region45: #{tpu_custom_call.1} parent=5 // pred_check
      %p397 = pneg %p396
    $region46: #{tpu_custom_call.1} parent=5 // pred_check_branch
      %399 = sbr.rel (%p397) target = $region48
    $region47: #{tpu_custom_call.1} parent=5 // pred_region
      %s400 = ssub.s32 %s13, 2
      // Predicated region
      $region49: #{tpu_custom_call.1} parent=47 // pred_check
        %p401 = pneg %p152
      $region50: #{tpu_custom_call.1} parent=47 // pred_check_branch
        %403 = sbr.rel (%p401) target = $region52
      $region51: #{tpu_custom_call.1} parent=47 // pred_region
        %s404 = smul.u32 4, %s19
        %p405 = scmp.lt.s32.totalorder %s404, 15
        %s406 = scalar_select %p405, %s404, 15
        %s407 = smul.addr %s406, 8
        %s408 = scalar_lea.vmem %s5, %s407
      $region52: #{tpu_custom_call.1} parent=47 // pred_fallthru
        _
    $region48: #{tpu_custom_call.1} parent=5 // pred_fallthru
      _
  $region6: #{tpu_custom_call.1} parent=0 // loop_footer
    %s17 = sadd.s32 1, %s13
  $region7: #{tpu_custom_call.1} parent=0 // loop_footer_branch
    %12 = sbr.rel target = $region3
  $region8: #{tpu_custom_call.1} parent=0 // loop_exit
    _

</llo_original>
